<compile_context>
chip_gen: v7x
topology: tpu7x:2x2x1
jax: 0.10.0
libtpu: 0.0.40
codegen_flags: <defaults>
</compile_context>

<pallas_src>
from functools import partial

import jax
import jax.numpy as jnp
import numpy as np
from jax.experimental import pallas as pl
from jax.experimental.pallas import tpu as pltpu


# --------------------------------------------------------------------------- #
# VMEM budget / tile sizing helpers
# --------------------------------------------------------------------------- #
def _vmem_budget_bytes():
    """Per-generation scoped-VMEM budget: ~3/4 of physical, capped at 96 MiB, floor 32 MiB."""
    try:
        info = pltpu.get_tpu_info()
        cap = getattr(info, "vmem_capacity_bytes", None)
        if cap is None:
            cap = getattr(info, "vmem_bytes", None)
        if cap:
            return int(max(32 * 1024 * 1024, min(int(cap) * 3 // 4, 96 * 1024 * 1024)))
    except Exception:
        pass
    # Fallback: safe on v7x (64 MiB physical) and leaves plenty of room on v5e/v6e (128 MiB).
    return 48 * 1024 * 1024


def _largest_divisor_leq(n, cap):
    cap = max(1, min(n, cap))
    for d in range(cap, 0, -1):
        if n % d == 0:
            return d
    return 1


def _pick_tiles(B, C, L, itemsize, vmem_limit):
    """Choose (b_tile, tile_l) so one block is ~vmem_limit/8 bytes and lane-dense."""
    tile_target_elems = max(128, (vmem_limit // 8) // max(1, itemsize))
    if L < 128:
        tile_l = L  # full last dim (satisfies the (8,128) rule via "equals full dim")
    else:
        max_tl = max(128, (tile_target_elems // max(C, 1)) // 128 * 128)
        tile_l = min(max_tl, (L // 128) * 128)  # multiple of 128, never exceeds L
    nl = pl.cdiv(L, tile_l)
    # Fold several batch rows per block when a single (C, tile_l) slab is small.
    b_cap = max(1, tile_target_elems // max(1, C * tile_l))
    b_tile = _largest_divisor_leq(B, b_cap)
    nb = B // b_tile
    mask_l = (nl * tile_l != L)
    return b_tile, nb, tile_l, nl, mask_l


# --------------------------------------------------------------------------- #
# Single-pass path (small inputs fully VMEM resident): 1x read + 1x write of x
# --------------------------------------------------------------------------- #
def _single_pass_kernel(x_ref, gamma_ref, beta_ref, o_ref, *, eps, n, denom):
    x = x_ref[...].astype(jnp.float32)                 # (B, C, L)
    xs = jnp.sum(x, axis=0)                            # (C, L)
    s = jnp.sum(xs, axis=1, keepdims=True)             # (C, 1)
    mean = s / n
    d = x - mean                                       # broadcast (C,1) over (B,C,L)
    dq = jnp.sum(d * d, axis=0)                        # (C, L)
    var = jnp.maximum(jnp.sum(dq, axis=1, keepdims=True) / denom, 0.0)
    scale = gamma_ref[0] * jax.lax.rsqrt(var + eps)    # (C, 1)
    o_ref[...] = (d * scale + beta_ref[0]).astype(o_ref.dtype)


# --------------------------------------------------------------------------- #
# Phase 1: per-(batch-tile) partial per-channel sums  (Sum x, Sum x^2)
# --------------------------------------------------------------------------- #
def _stats_kernel(x_ref, psum_ref, psq_ref, *, length, tile_l, mask_l):
    li = pl.program_id(1)

    x = x_ref[...].astype(jnp.float32)                 # (b_tile, C, tile_l)
    if mask_l:
        lane = li * tile_l + jax.lax.broadcasted_iota(jnp.int32, (1, 1, tile_l), 2)
        x = jnp.where(lane < length, x, 0.0)

    xs = jnp.sum(x, axis=0)                            # (C, tile_l)   VPU adds
    xq = jnp.sum(x * x, axis=0)                        # (C, tile_l)
    ps = jnp.sum(xs, axis=1, keepdims=True)            # (C, 1)        XLU lane reduce
    pq = jnp.sum(xq, axis=1, keepdims=True)            # (C, 1)

    @pl.when(li == 0)
    def _init():
        psum_ref[0] = ps
        psq_ref[0] = pq

    @pl.when(li > 0)
    def _acc():
        psum_ref[0] += ps
        psq_ref[0] += pq


# --------------------------------------------------------------------------- #
# Phase 2: out = x * scale + shift   (pure streaming, both axes parallel)
# --------------------------------------------------------------------------- #
def _normalize_kernel(scale_ref, shift_ref, x_ref, o_ref):
    x = x_ref[...].astype(jnp.float32)                 # (b_tile, C, tile_l)
    o_ref[...] = (x * scale_ref[...] + shift_ref[...]).astype(o_ref.dtype)


# --------------------------------------------------------------------------- #
# Wrapper
# --------------------------------------------------------------------------- #
def similarity_pattern_bn1d(x, gamma, beta, eps=1.0, single_pass=None):
    """x: (B, C, L). gamma, beta: shape (1,). Returns (B, C, L) matching torch semantics."""
    B, C, L = x.shape
    n = float(B * L)
    denom = float(max(B * L - 1, 1))
    eps = float(eps)

    gamma = gamma.astype(jnp.float32)
    beta = beta.astype(jnp.float32)

    vmem_limit = _vmem_budget_bytes()
    itemsize = jnp.dtype(x.dtype).itemsize

    if single_pass is None:
        # Whole problem (plus f32 temps, double-buffer slack) comfortably fits in VMEM.
        single_pass = (B * C * L * 4 * 8) <= vmem_limit

    if single_pass:
        return pl.pallas_call(
            partial(_single_pass_kernel, eps=eps, n=n, denom=denom),
            out_shape=jax.ShapeDtypeStruct((B, C, L), x.dtype),
            grid=(1,),
            in_specs=[
                pl.BlockSpec((B, C, L), lambda i: (0, 0, 0)),
                pl.BlockSpec(memory_space=pltpu.MemorySpace.SMEM),   # gamma scalar
                pl.BlockSpec(memory_space=pltpu.MemorySpace.SMEM),   # beta scalar
            ],
            out_specs=pl.BlockSpec((B, C, L), lambda i: (0, 0, 0)),
            compiler_params=pltpu.CompilerParams(vmem_limit_bytes=vmem_limit),
        )(x, gamma, beta)

    # ---- Two-phase streaming path -------------------------------------------
    b_tile, nb, tile_l, nl, mask_l = _pick_tiles(B, C, L, itemsize, vmem_limit)

    # Phase 1: per-batch-tile partial sums; leading axis "parallel" (megacore),
    # reduction axis (L tiles) trailing + "arbitrary" with output-block accumulation.
    psum, psq = pl.pallas_call(
        partial(_stats_kernel, length=L, tile_l=tile_l, mask_l=mask_l),
        out_shape=(
            jax.ShapeDtypeStruct((nb, C, 1), jnp.float32),
            jax.ShapeDtypeStruct((nb, C, 1), jnp.float32),
        ),
        grid=(nb, nl),
        in_specs=[pl.BlockSpec((b_tile, C, tile_l), lambda bi, li: (bi, 0, li))],
        out_specs=(
            pl.BlockSpec((1, C, 1), lambda bi, li: (bi, 0, 0)),
            pl.BlockSpec((1, C, 1), lambda bi, li: (bi, 0, 0)),
        ),
        compiler_params=pltpu.CompilerParams(
            dimension_semantics=("parallel", "arbitrary"),
            vmem_limit_bytes=vmem_limit,
        ),
    )(x)

    # Tiny final combine in plain JAX (negligible cost, keeps phase 1 core-parallel).
    s = jnp.sum(psum, axis=(0, 2))                     # (C,)  Sum x
    sq = jnp.sum(psq, axis=(0, 2))                     # (C,)  Sum x^2
    mean = s / n
    var = jnp.maximum((sq - s * mean) / denom, 0.0)    # unbiased; clamped vs cancellation
    scale_c = gamma[0] * jax.lax.rsqrt(var + eps)
    shift_c = beta[0] - mean * scale_c
    scale = scale_c.reshape(C, 1).astype(jnp.float32)
    shift = shift_c.reshape(C, 1).astype(jnp.float32)

    # Phase 2: normalize. Both grid axes parallel; lane-dense output tiles.
    # (input_output_aliases={2: 0} would donate x in-place; omitted to keep x valid for callers.)
    out = pl.pallas_call(
        _normalize_kernel,
        out_shape=jax.ShapeDtypeStruct((B, C, L), x.dtype),
        grid=(nb, nl),
        in_specs=[
            pl.BlockSpec((C, 1), lambda bi, li: (0, 0)),             # scale
            pl.BlockSpec((C, 1), lambda bi, li: (0, 0)),             # shift
            pl.BlockSpec((b_tile, C, tile_l), lambda bi, li: (bi, 0, li)),
        ],
        out_specs=pl.BlockSpec((b_tile, C, tile_l), lambda bi, li: (bi, 0, li)),
        compiler_params=pltpu.CompilerParams(
            dimension_semantics=("parallel", "parallel"),
            vmem_limit_bytes=vmem_limit,
        ),
    )(scale, shift, x)

    return out


def _reference(x, gamma, beta, eps=1.0):
    mean = jnp.mean(x, axis=(0, 2), keepdims=True)
    var = jnp.var(x, axis=(0, 2), keepdims=True, ddof=1)   # unbiased, like torch.var
    return (x - mean) / jnp.sqrt(var + eps) * gamma[0] + beta[0]


if __name__ == "__main__":
    key = jax.random.PRNGKey(0)
    k1, k2 = jax.random.split(key)

    gamma = jnp.ones((1,), dtype=jnp.float32)   # nn.Parameter(torch.ones([1]))
    beta = jnp.zeros((1,), dtype=jnp.float32)   # nn.Parameter(torch.zeros([1]))
    eps = 1.0

    # Case 1: small input -> fused single-pass (fully VMEM-resident) path.
    x1 = jax.random.normal(k1, (2, 4, 16), dtype=jnp.float32)
    out1 = jax.block_until_ready(similarity_pattern_bn1d(x1, gamma, beta, eps))
    ref1 = _reference(x1, gamma, beta, eps)
    assert out1.shape == x1.shape
    assert np.allclose(np.asarray(out1), np.asarray(ref1), atol=1e-5, rtol=1e-5)

    # Case 2: same data forced through the two-phase streaming path.
    out2 = jax.block_until_ready(
        similarity_pattern_bn1d(x1, gamma, beta, eps, single_pass=False))
    assert np.allclose(np.asarray(out2), np.asarray(ref1), atol=1e-5, rtol=1e-5)

    # Case 3: non-128-multiple length exercises the tail lane mask + clipped tail writes.
    x3 = jax.random.normal(k2, (3, 4, 200), dtype=jnp.float32)
    out3 = jax.block_until_ready(
        similarity_pattern_bn1d(x3, gamma, beta, eps, single_pass=False))
    ref3 = _reference(x3, gamma, beta, eps)
    assert np.allclose(np.asarray(out3), np.asarray(ref3), atol=1e-5, rtol=1e-5)

    print("KERNEL_OK")
</pallas_src>

<mosaic_0001>
module attributes {stable_mosaic.version = 11 : i64} {
  func.func @_single_pass_kernel(%arg0: i32, %arg1: memref<2x4x16xf32, #tpu.memory_space<vmem>>, %arg2: memref<1xf32, #tpu.memory_space<smem>>, %arg3: memref<1xf32, #tpu.memory_space<smem>>, %arg4: memref<2x4x16xf32, #tpu.memory_space<vmem>>) attributes {dimension_semantics = [#tpu.dimension_semantics<arbitrary>], iteration_bounds = array<i64: 1>, scalar_prefetch = 0 : i64, scratch_operands = 0 : i64, tpu.core_type = #tpu.core_type<tc>, window_params = [{pipeline_mode = #tpu.pipeline_mode<synchronous>, transform_indices = @transform_0, window_bounds = array<i64: 2, 4, 16>}, {transform_indices = @transform_1, window_bounds = array<i64: 1>}, {transform_indices = @transform_2, window_bounds = array<i64: 1>}, {pipeline_mode = #tpu.pipeline_mode<synchronous>, transform_indices = @transform_3, window_bounds = array<i64: 2, 4, 16>}]} {
    %c0 = arith.constant 0 : index
    %c0_0 = arith.constant 0 : index
    %c0_1 = arith.constant 0 : index
    %0 = vector.load %arg1[%c0, %c0_0, %c0_1] : memref<2x4x16xf32, #tpu.memory_space<vmem>>, vector<2x4x16xf32>
    %cst = arith.constant dense<0.000000e+00> : vector<4x16xf32>
    %1 = vector.multi_reduction <add>, %0, %cst [0] : vector<2x4x16xf32> to vector<4x16xf32>
    %cst_2 = arith.constant dense<0.000000e+00> : vector<4xf32>
    %2 = vector.multi_reduction <add>, %1, %cst_2 [1] : vector<4x16xf32> to vector<4xf32>
    %3 = vector.shape_cast %2 : vector<4xf32> to vector<4x1xf32>
    %cst_3 = arith.constant 3.200000e+01 : f32
    %4 = vector.broadcast %cst_3 : f32 to vector<4x1xf32>
    %5 = arith.divf %3, %4 : vector<4x1xf32>
    %6 = vector.shape_cast %5 : vector<4x1xf32> to vector<1x4x1xf32>
    %7 = vector.broadcast %6 : vector<1x4x1xf32> to vector<2x4x16xf32>
    %8 = arith.subf %0, %7 : vector<2x4x16xf32>
    %9 = arith.mulf %8, %8 : vector<2x4x16xf32>
    %cst_4 = arith.constant dense<0.000000e+00> : vector<4x16xf32>
    %10 = vector.multi_reduction <add>, %9, %cst_4 [0] : vector<2x4x16xf32> to vector<4x16xf32>
    %cst_5 = arith.constant dense<0.000000e+00> : vector<4xf32>
    %11 = vector.multi_reduction <add>, %10, %cst_5 [1] : vector<4x16xf32> to vector<4xf32>
    %12 = vector.shape_cast %11 : vector<4xf32> to vector<4x1xf32>
    %cst_6 = arith.constant 3.100000e+01 : f32
    %13 = vector.broadcast %cst_6 : f32 to vector<4x1xf32>
    %14 = arith.divf %12, %13 : vector<4x1xf32>
    %cst_7 = arith.constant 0.000000e+00 : f32
    %15 = vector.broadcast %cst_7 : f32 to vector<4x1xf32>
    %16 = arith.maximumf %14, %15 : vector<4x1xf32>
    %c0_8 = arith.constant 0 : index
    %17 = memref.load %arg2[%c0_8] : memref<1xf32, #tpu.memory_space<smem>>
    %cst_9 = arith.constant 1.000000e+00 : f32
    %18 = vector.broadcast %cst_9 : f32 to vector<4x1xf32>
    %19 = arith.addf %16, %18 : vector<4x1xf32>
    %20 = math.rsqrt %19 : vector<4x1xf32>
    %21 = vector.broadcast %17 : f32 to vector<4x1xf32>
    %22 = arith.mulf %21, %20 : vector<4x1xf32>
    %23 = vector.shape_cast %22 : vector<4x1xf32> to vector<1x4x1xf32>
    %24 = vector.broadcast %23 : vector<1x4x1xf32> to vector<2x4x16xf32>
    %25 = arith.mulf %8, %24 : vector<2x4x16xf32>
    %c0_10 = arith.constant 0 : index
    %26 = memref.load %arg3[%c0_10] : memref<1xf32, #tpu.memory_space<smem>>
    %27 = vector.broadcast %26 : f32 to vector<2x4x16xf32>
    %28 = arith.addf %25, %27 : vector<2x4x16xf32>
    %c0_11 = arith.constant 0 : index
    %c0_12 = arith.constant 0 : index
    %c0_13 = arith.constant 0 : index
    %29 = vector.load %arg4[%c0_11, %c0_12, %c0_13] : memref<2x4x16xf32, #tpu.memory_space<vmem>>, vector<2x4x16xf32>
    tpu.vector_store %arg4[%c0_11, %c0_12, %c0_13], %28 {strides = array<i32>} : memref<2x4x16xf32, #tpu.memory_space<vmem>>, vector<2x4x16xf32>,
    return
  }
  func.func @transform_0(%arg0: i32) -> (i32, i32, i32) {
    %c0_i32 = arith.constant 0 : i32
    %c0_i32_0 = arith.constant 0 : i32
    %c0_i32_1 = arith.constant 0 : i32
    %c0_i32_2 = arith.constant 0 : i32
    return %c0_i32, %c0_i32_0, %c0_i32_1 : i32, i32, i32
  }
  func.func @transform_1(%arg0: i32) -> i32 {
    %c0_i32 = arith.constant 0 : i32
    %c0_i32_0 = arith.constant 0 : i32
    return %c0_i32 : i32
  }
  func.func @transform_2(%arg0: i32) -> i32 {
    %c0_i32 = arith.constant 0 : i32
    %c0_i32_0 = arith.constant 0 : i32
    return %c0_i32 : i32
  }
  func.func @transform_3(%arg0: i32) -> (i32, i32, i32) {
    %c0_i32 = arith.constant 0 : i32
    %c0_i32_0 = arith.constant 0 : i32
    %c0_i32_1 = arith.constant 0 : i32
    %c0_i32_2 = arith.constant 0 : i32
    return %c0_i32, %c0_i32_0, %c0_i32_1 : i32, i32, i32
  }
}

</mosaic_0001>

<llo_original>
// kernel: tpu_custom_call.1
$region0: #{tpu_custom_call.1}
  #allocation0 [shape = 'u32[]', space=smem, size = 0x4, offset = 0x4, fixed_abs, tag = 'smem constant byte address 0x4 - core index']
  #allocation1 [shape = 'u32[144,128]{1,0:T(1,128)}', space=vmem, size = 0x12000, scoped, tag = 'internal scratch']
  #allocation2 [shape = 'f32[1]{0:T(128)S(6)}', space=smem, size = 0x200, scoped, tag = 'scoped memory for tpu_custom_call.1']
  #allocation3 [shape = 'f32[1]{0:T(128)S(6)}', space=smem, size = 0x200, scoped, tag = 'scoped memory for tpu_custom_call.1']
  %s0 = inlined_call_operand.hbm [shape: f32[2,4,16], index: 0, kind: input, shape index: {}]
  %s1 = inlined_call_operand.<no memory space> [shape: f32[1], index: 1, kind: input, shape index: {}]
  %s2 = inlined_call_operand.<no memory space> [shape: f32[1], index: 2, kind: input, shape index: {}]
  %s3 = inlined_call_operand.hbm [shape: f32[2,4,16], index: 3, kind: output, shape index: {}]
  %s4 = sld [smem:[#allocation0]]
  $region26: #{tpu_custom_call.1} parent=0
    _
  %s6 = ssub.s32 1, %s4
  %s7 = scalar_select 0, %s6, %s4
  %8 = sst [smem:[#allocation2]] %s1
  %9 = sst [smem:[#allocation3]] %s2
  $region1: #{tpu_custom_call.1} parent=0
    #allocation4 [shape = 'u8[4096]{0}', space=vmem, size = 0x1000, scoped, tag = 'input window, operand 0, single buffered']
    #allocation5 [shape = 's32[1]{0}', space=sflag, size = 0x4, scoped, tag = 'scoped memory for tpu_custom_call.1']
    #allocation6 [shape = 's32[1]{0}', space=sflag, size = 0x4, scoped, tag = 'scoped memory for tpu_custom_call.1']
    #allocation7 [shape = 'u8[4096]{0}', space=vmem, size = 0x1000, scoped, tag = 'output window, operand 0, single buffered']
    %10 = vsyncpa [#allocation5], 0
    %11 = vsyncpa [#allocation6], 0
    // Predicated region
    $region2: #{tpu_custom_call.1} parent=1 // pred_check
      _
    $region3: #{tpu_custom_call.1} parent=1 // pred_check_branch
      %13 = sbr.rel (0) target = $region5
    $region4: #{tpu_custom_call.1} parent=1 // pred_region
      %s15 = ssub.s32 128, 128
      %16 = vsyncadd [#allocation5], %s15
      %s17 = sshll.u32 [#allocation4], 4
      %s18 = int_to_ptr.vmem [resolvable:$true] %s17
      %23 = dma.hbm_to_vmem [thread:$0]  %s0, 128, %s18, [#allocation5], 64, 64, 4
    $region5: #{tpu_custom_call.1} parent=1 // pred_fallthru
      _
    // Predicated region
    $region6: #{tpu_custom_call.1} parent=1 // pred_check
      _
    $region7: #{tpu_custom_call.1} parent=1 // pred_check_branch
      %25 = sbr.rel (0) target = $region9
    $region8: #{tpu_custom_call.1} parent=1 // pred_region
      _
    $region9: #{tpu_custom_call.1} parent=1 // pred_fallthru
      _
    // Predicated region
    $region10: #{tpu_custom_call.1} parent=1 // pred_check
      _
    $region11: #{tpu_custom_call.1} parent=1 // pred_check_branch
      %27 = sbr.rel (0) target = $region13
    $region12: #{tpu_custom_call.1} parent=1 // pred_region
      _
    $region13: #{tpu_custom_call.1} parent=1 // pred_fallthru
      _
    // Predicated region
    $region14: #{tpu_custom_call.1} parent=1 // pred_check
      _
    $region15: #{tpu_custom_call.1} parent=1 // pred_check_branch
      %29 = sbr.rel (0) target = $region17
    $region16: #{tpu_custom_call.1} parent=1 // pred_region
      %30 = dma.done [#allocation5], 128
    $region17: #{tpu_custom_call.1} parent=1 // pred_fallthru
      _
    %v31 = vld [vmem:[#allocation4] sm:$0xf]
    %v32 = vld [vmem:[#allocation4 + $0x4] sm:$0xf]
    %vm33 = vcmask 125952
    %v34 = vsel %vm33, %v31, 0.0
    %v35 = vsel %vm33, %v32, 0.0
    %v36 = vadd.f32 %v34, %v35
    %v37 = vsel %vm33, %v36, 0.0
    %38 = vadd.xlane.f32.xlu0 %v37
    %v39 = vpop.xlane.xlu0 %38
    %v40 = vrcp.pop 32.0
    %v41 = vmul.f32 %v39, %v40
    %v42 = vsub.f32 %v31, %v41
    %v43 = vsub.f32 %v32, %v41
    %v44 = vmul.f32 %v42, %v42
    %v45 = vmul.f32 %v43, %v43
    %v46 = vsel %vm33, %v44, 0.0
    %v47 = vsel %vm33, %v45, 0.0
    %v48 = vadd.f32 %v46, %v47
    %v49 = vsel %vm33, %v48, 0.0
    %50 = vadd.xlane.f32.xlu0 %v49
    %v51 = vpop.xlane.xlu0 %50
    %v52 = vrcp.pop 31.0
    %v53 = vmul.f32 %v51, %v52
    %v54 = vmax.f32 %v53, 0.0
    %s55 = sld [smem:[#allocation2]]
    %v56 = vadd.f32 %v54, 1.0
    %v57 = vrsqrt.pop %v56
    %v58 = vstv %s55
    %v59 = vmul.f32 %v58, %v57
    %v60 = vmul.f32 %v42, %v59
    %v61 = vmul.f32 %v43, %v59
    %s62 = sld [smem:[#allocation3]]
    %v63 = vstv %s62
    %v64 = vadd.f32 %v60, %v63
    %v65 = vadd.f32 %v61, %v63
    %66 = vst.msk [vmem:[#allocation7] sm:$0xf] %vm33, %v64
    %67 = vst.msk [vmem:[#allocation7 + $0x4] sm:$0xf] %vm33, %v65
    // Predicated region
    $region18: #{tpu_custom_call.1} parent=1 // pred_check
      _
    $region19: #{tpu_custom_call.1} parent=1 // pred_check_branch
      %69 = sbr.rel (0) target = $region21
    $region20: #{tpu_custom_call.1} parent=1 // pred_region
      %s71 = ssub.s32 128, 128
      %72 = vsyncadd [#allocation6], %s71
      %s73 = sshll.u32 [#allocation7], 4
      %s74 = int_to_ptr.vmem [resolvable:$true] %s73
      %79 = dma.vmem_to_hbm [thread:$0]  %s74, 128, %s3, [#allocation6], 64, 64, 4
    $region21: #{tpu_custom_call.1} parent=1 // pred_fallthru
      _
    // Predicated region
    $region22: #{tpu_custom_call.1} parent=1 // pred_check
      _
    $region23: #{tpu_custom_call.1} parent=1 // pred_check_branch
      %81 = sbr.rel (0) target = $region25
    $region24: #{tpu_custom_call.1} parent=1 // pred_region
      %82 = dma.done [#allocation6], 128
    $region25: #{tpu_custom_call.1} parent=1 // pred_fallthru
      _
    %83 = vsyncpa [#allocation5], 1
    %84 = vsyncpa [#allocation6], 1

</llo_original>
